<compile_context>
chip_gen: v6e
topology: v6e:2x2x1
jax: 0.10.0
libtpu: 0.0.40
codegen_flags: <defaults>
</compile_context>

<pallas_src>
import jax
import jax.numpy as jnp
from jax.experimental import pallas as pl
from jax.experimental.pallas import tpu as pltpu


def ffnn_kernel(x_ref,
                w1_ref, b1_ref,
                w2_ref, b2_ref,
                w3_ref, b3_ref,
                w4_ref, b4_ref,
                w5_ref, b5_ref,
                o_ref):
    # fc1 + ReLU  (bf16 operands, f32 accumulation; elementwise in f32)
    h = jnp.dot(x_ref[...], w1_ref[...], preferred_element_type=jnp.float32)
    h = jnp.maximum(h + b1_ref[...], 0.0)
    # fc2 + ReLU
    h = jnp.dot(h.astype(w2_ref.dtype), w2_ref[...],
                preferred_element_type=jnp.float32)
    h = jnp.maximum(h + b2_ref[...], 0.0)
    # fc3 + ReLU
    h = jnp.dot(h.astype(w3_ref.dtype), w3_ref[...],
                preferred_element_type=jnp.float32)
    h = jnp.maximum(h + b3_ref[...], 0.0)
    # fc4 + ReLU
    h = jnp.dot(h.astype(w4_ref.dtype), w4_ref[...],
                preferred_element_type=jnp.float32)
    h = jnp.maximum(h + b4_ref[...], 0.0)
    # fc5 (logits)
    logits = jnp.dot(h.astype(w5_ref.dtype), w5_ref[...],
                     preferred_element_type=jnp.float32) + b5_ref[...]
    # numerically-stable softmax over feature axis (PyTorch dim=1)
    m = jnp.max(logits, axis=-1, keepdims=True)
    e = jnp.exp(logits - m)
    denom = jnp.sum(e, axis=-1, keepdims=True)
    o_ref[...] = (e * pl.reciprocal(denom, approx=True)).astype(o_ref.dtype)


def _round_up(n, m):
    return ((n + m - 1) // m) * m


def advanced_ffnn_forward(x, params, *, block_m=512, compute_dtype=jnp.bfloat16):
    """params: dict with w1..w5 as (in, out) and b1..b5 as (1, out)."""
    batch, in_features = x.shape
    num_classes = params["w5"].shape[1]

    # Batch tile: multiple of 8 (sublane), capped at block_m.  Large batches
    # get MXU-filling tiles that amortize per-step overhead; tiny batches
    # shrink the tile so we don't over-pad.
    tm = min(block_m, _round_up(batch, 8))
    padded_batch = _round_up(batch, tm)
    if padded_batch != batch:
        x = jnp.pad(x, ((0, padded_batch - batch), (0, 0)))
    grid = (padded_batch // tm,)

    # bf16 matmul operands (f32 accumulation inside the kernel); biases stay
    # f32 for the VPU epilogue.
    xc = x.astype(compute_dtype)
    weights = [params[f"w{i}"].astype(compute_dtype) for i in range(1, 6)]
    biases = [params[f"b{i}"].astype(jnp.float32) for i in range(1, 6)]

    def resident_spec(a):
        # constant index_map: DMA'd once, stays VMEM-resident across steps
        return pl.BlockSpec(a.shape, lambda i: (0, 0))

    in_specs = [pl.BlockSpec((tm, in_features), lambda i: (i, 0))]
    args = [xc]
    for w, b in zip(weights, biases):
        in_specs += [resident_spec(w), resident_spec(b)]
        args += [w, b]

    out = pl.pallas_call(
        ffnn_kernel,
        grid=grid,
        in_specs=in_specs,
        out_specs=pl.BlockSpec((tm, num_classes), lambda i: (i, 0)),
        out_shape=jax.ShapeDtypeStruct((padded_batch, num_classes), jnp.float32),
        compiler_params=pltpu.CompilerParams(
            dimension_semantics=("parallel",)),
    )(*args)
    return out[:batch]


def init_params(key, in_features, num_classes):
    dims = [in_features, 256, 128, 64, 32, num_classes]
    params = {}
    for i in range(5):
        key, kw, kb = jax.random.split(key, 3)
        fan_in, fan_out = dims[i], dims[i + 1]
        w = jax.random.normal(kw, (fan_in, fan_out), jnp.float32) * 0.05
        b = jax.random.normal(kb, (1, fan_out), jnp.float32) * 0.01
        params[f"w{i + 1}"] = w
        params[f"b{i + 1}"] = b
    return params


def _reference(x, params):
    h = x
    for i in range(1, 5):
        h = jnp.maximum(h @ params[f"w{i}"] + params[f"b{i}"], 0.0)
    logits = h @ params["w5"] + params["b5"]
    return jax.nn.softmax(logits, axis=1)


if __name__ == "__main__":
    key = jax.random.PRNGKey(0)
    key, kx = jax.random.split(key)

    batch = 8
    in_features = 32
    num_classes = 8

    x = jax.random.normal(kx, (batch, in_features), jnp.float32)
    params = init_params(key, in_features, num_classes)

    out = jax.block_until_ready(advanced_ffnn_forward(x, params))
    ref = _reference(x, params)
    assert out.shape == (batch, num_classes)
    # bf16 matmul operands + approx reciprocal => relaxed tolerances
    assert jnp.allclose(jnp.sum(out, axis=1), 1.0, atol=1e-2)
    assert jnp.allclose(out, ref, atol=2e-2, rtol=2e-2)

    # exercise the multi-tile gridded path + ragged-batch padding
    key, kx2 = jax.random.split(key)
    x2 = jax.random.normal(kx2, (1200, in_features), jnp.float32)
    out2 = jax.block_until_ready(advanced_ffnn_forward(x2, params))
    ref2 = _reference(x2, params)
    assert out2.shape == (1200, num_classes)
    assert jnp.allclose(jnp.sum(out2, axis=1), 1.0, atol=1e-2)
    assert jnp.allclose(out2, ref2, atol=2e-2, rtol=2e-2)

    print("KERNEL_OK")
</pallas_src>

<mosaic_0001>
module attributes {stable_mosaic.version = 11 : i64} {
  func.func @ffnn_kernel(%arg0: i32, %arg1: memref<8x32xbf16, #tpu.memory_space<vmem>>, %arg2: memref<32x256xbf16, #tpu.memory_space<vmem>>, %arg3: memref<1x256xf32, #tpu.memory_space<vmem>>, %arg4: memref<256x128xbf16, #tpu.memory_space<vmem>>, %arg5: memref<1x128xf32, #tpu.memory_space<vmem>>, %arg6: memref<128x64xbf16, #tpu.memory_space<vmem>>, %arg7: memref<1x64xf32, #tpu.memory_space<vmem>>, %arg8: memref<64x32xbf16, #tpu.memory_space<vmem>>, %arg9: memref<1x32xf32, #tpu.memory_space<vmem>>, %arg10: memref<32x8xbf16, #tpu.memory_space<vmem>>, %arg11: memref<1x8xf32, #tpu.memory_space<vmem>>, %arg12: memref<8x8xf32, #tpu.memory_space<vmem>>) attributes {dimension_semantics = [#tpu.dimension_semantics<parallel>], iteration_bounds = array<i64: 1>, scalar_prefetch = 0 : i64, scratch_operands = 0 : i64, tpu.core_type = #tpu.core_type<tc>, window_params = [{transform_indices = @transform_0, window_bounds = array<i64: 8, 32>}, {pipeline_mode = #tpu.pipeline_mode<synchronous>, transform_indices = @transform_1, window_bounds = array<i64: 32, 256>}, {pipeline_mode = #tpu.pipeline_mode<synchronous>, transform_indices = @transform_2, window_bounds = array<i64: 1, 256>}, {pipeline_mode = #tpu.pipeline_mode<synchronous>, transform_indices = @transform_3, window_bounds = array<i64: 256, 128>}, {pipeline_mode = #tpu.pipeline_mode<synchronous>, transform_indices = @transform_4, window_bounds = array<i64: 1, 128>}, {pipeline_mode = #tpu.pipeline_mode<synchronous>, transform_indices = @transform_5, window_bounds = array<i64: 128, 64>}, {pipeline_mode = #tpu.pipeline_mode<synchronous>, transform_indices = @transform_6, window_bounds = array<i64: 1, 64>}, {pipeline_mode = #tpu.pipeline_mode<synchronous>, transform_indices = @transform_7, window_bounds = array<i64: 64, 32>}, {pipeline_mode = #tpu.pipeline_mode<synchronous>, transform_indices = @transform_8, window_bounds = array<i64: 1, 32>}, {pipeline_mode = #tpu.pipeline_mode<synchronous>, transform_indices = @transform_9, window_bounds = array<i64: 32, 8>}, {pipeline_mode = #tpu.pipeline_mode<synchronous>, transform_indices = @transform_10, window_bounds = array<i64: 1, 8>}, {transform_indices = @transform_11, window_bounds = array<i64: 8, 8>}]} {
    %c0 = arith.constant 0 : index
    %c0_0 = arith.constant 0 : index
    %0 = vector.load %arg1[%c0, %c0_0] : memref<8x32xbf16, #tpu.memory_space<vmem>>, vector<8x32xbf16>
    %c0_1 = arith.constant 0 : index
    %c0_2 = arith.constant 0 : index
    %1 = vector.load %arg2[%c0_1, %c0_2] : memref<32x256xbf16, #tpu.memory_space<vmem>>, vector<32x256xbf16>
    %cst = arith.constant dense<0.000000e+00> : vector<8x256xf32>
    %2 = tpu.matmul %0, %1, %cst {dimension_numbers = #tpu.dot_dimension_numbers<[1], [0], [0], [1], [0, 0, 1, 1], [], []>} : vector<8x32xbf16>, vector<32x256xbf16>, vector<8x256xf32> -> vector<8x256xf32>
    %c0_3 = arith.constant 0 : index
    %c0_4 = arith.constant 0 : index
    %3 = vector.load %arg3[%c0_3, %c0_4] : memref<1x256xf32, #tpu.memory_space<vmem>>, vector<1x256xf32>
    %4 = vector.broadcast %3 : vector<1x256xf32> to vector<8x256xf32>
    %5 = arith.addf %2, %4 : vector<8x256xf32>
    %cst_5 = arith.constant 0.000000e+00 : f32
    %6 = vector.broadcast %cst_5 : f32 to vector<8x256xf32>
    %7 = arith.maximumf %5, %6 : vector<8x256xf32>
    %8 = arith.truncf %7 : vector<8x256xf32> to vector<8x256xbf16>
    %c0_6 = arith.constant 0 : index
    %c0_7 = arith.constant 0 : index
    %9 = vector.load %arg4[%c0_6, %c0_7] : memref<256x128xbf16, #tpu.memory_space<vmem>>, vector<256x128xbf16>
    %cst_8 = arith.constant dense<0.000000e+00> : vector<8x128xf32>
    %10 = tpu.matmul %8, %9, %cst_8 {dimension_numbers = #tpu.dot_dimension_numbers<[1], [0], [0], [1], [0, 0, 1, 1], [], []>} : vector<8x256xbf16>, vector<256x128xbf16>, vector<8x128xf32> -> vector<8x128xf32>
    %c0_9 = arith.constant 0 : index
    %c0_10 = arith.constant 0 : index
    %11 = vector.load %arg5[%c0_9, %c0_10] : memref<1x128xf32, #tpu.memory_space<vmem>>, vector<1x128xf32>
    %12 = vector.broadcast %11 : vector<1x128xf32> to vector<8x128xf32>
    %13 = arith.addf %10, %12 : vector<8x128xf32>
    %cst_11 = arith.constant 0.000000e+00 : f32
    %14 = vector.broadcast %cst_11 : f32 to vector<8x128xf32>
    %15 = arith.maximumf %13, %14 : vector<8x128xf32>
    %16 = arith.truncf %15 : vector<8x128xf32> to vector<8x128xbf16>
    %c0_12 = arith.constant 0 : index
    %c0_13 = arith.constant 0 : index
    %17 = vector.load %arg6[%c0_12, %c0_13] : memref<128x64xbf16, #tpu.memory_space<vmem>>, vector<128x64xbf16>
    %cst_14 = arith.constant dense<0.000000e+00> : vector<8x64xf32>
    %18 = tpu.matmul %16, %17, %cst_14 {dimension_numbers = #tpu.dot_dimension_numbers<[1], [0], [0], [1], [0, 0, 1, 1], [], []>} : vector<8x128xbf16>, vector<128x64xbf16>, vector<8x64xf32> -> vector<8x64xf32>
    %c0_15 = arith.constant 0 : index
    %c0_16 = arith.constant 0 : index
    %19 = vector.load %arg7[%c0_15, %c0_16] : memref<1x64xf32, #tpu.memory_space<vmem>>, vector<1x64xf32>
    %20 = vector.broadcast %19 : vector<1x64xf32> to vector<8x64xf32>
    %21 = arith.addf %18, %20 : vector<8x64xf32>
    %cst_17 = arith.constant 0.000000e+00 : f32
    %22 = vector.broadcast %cst_17 : f32 to vector<8x64xf32>
    %23 = arith.maximumf %21, %22 : vector<8x64xf32>
    %24 = arith.truncf %23 : vector<8x64xf32> to vector<8x64xbf16>
    %c0_18 = arith.constant 0 : index
    %c0_19 = arith.constant 0 : index
    %25 = vector.load %arg8[%c0_18, %c0_19] : memref<64x32xbf16, #tpu.memory_space<vmem>>, vector<64x32xbf16>
    %cst_20 = arith.constant dense<0.000000e+00> : vector<8x32xf32>
    %26 = tpu.matmul %24, %25, %cst_20 {dimension_numbers = #tpu.dot_dimension_numbers<[1], [0], [0], [1], [0, 0, 1, 1], [], []>} : vector<8x64xbf16>, vector<64x32xbf16>, vector<8x32xf32> -> vector<8x32xf32>
    %c0_21 = arith.constant 0 : index
    %c0_22 = arith.constant 0 : index
    %27 = vector.load %arg9[%c0_21, %c0_22] : memref<1x32xf32, #tpu.memory_space<vmem>>, vector<1x32xf32>
    %28 = vector.broadcast %27 : vector<1x32xf32> to vector<8x32xf32>
    %29 = arith.addf %26, %28 : vector<8x32xf32>
    %cst_23 = arith.constant 0.000000e+00 : f32
    %30 = vector.broadcast %cst_23 : f32 to vector<8x32xf32>
    %31 = arith.maximumf %29, %30 : vector<8x32xf32>
    %32 = arith.truncf %31 : vector<8x32xf32> to vector<8x32xbf16>
    %c0_24 = arith.constant 0 : index
    %c0_25 = arith.constant 0 : index
    %33 = vector.load %arg10[%c0_24, %c0_25] : memref<32x8xbf16, #tpu.memory_space<vmem>>, vector<32x8xbf16>
    %cst_26 = arith.constant dense<0.000000e+00> : vector<8x8xf32>
    %34 = tpu.matmul %32, %33, %cst_26 {dimension_numbers = #tpu.dot_dimension_numbers<[1], [0], [0], [1], [0, 0, 1, 1], [], []>} : vector<8x32xbf16>, vector<32x8xbf16>, vector<8x8xf32> -> vector<8x8xf32>
    %c0_27 = arith.constant 0 : index
    %c0_28 = arith.constant 0 : index
    %35 = vector.load %arg11[%c0_27, %c0_28] : memref<1x8xf32, #tpu.memory_space<vmem>>, vector<1x8xf32>
    %36 = vector.broadcast %35 : vector<1x8xf32> to vector<8x8xf32>
    %37 = arith.addf %34, %36 : vector<8x8xf32>
    %cst_29 = arith.constant dense<0xFF800000> : vector<8xf32>
    %38 = vector.multi_reduction <maximumf>, %37, %cst_29 [1] : vector<8x8xf32> to vector<8xf32>
    %39 = vector.shape_cast %38 : vector<8xf32> to vector<8x1xf32>
    %40 = vector.broadcast %39 : vector<8x1xf32> to vector<8x8xf32>
    %41 = arith.subf %37, %40 : vector<8x8xf32>
    %42 = math.exp %41 : vector<8x8xf32>
    %cst_30 = arith.constant dense<0.000000e+00> : vector<8xf32>
    %43 = vector.multi_reduction <add>, %42, %cst_30 [1] : vector<8x8xf32> to vector<8xf32>
    %44 = vector.shape_cast %43 : vector<8xf32> to vector<8x1xf32>
    %45 = tpu.reciprocal %44 {approx = true} : vector<8x1xf32> -> vector<8x1xf32>
    %46 = vector.broadcast %45 : vector<8x1xf32> to vector<8x8xf32>
    %47 = arith.mulf %42, %46 : vector<8x8xf32>
    %c0_31 = arith.constant 0 : index
    %c0_32 = arith.constant 0 : index
    %48 = vector.load %arg12[%c0_31, %c0_32] : memref<8x8xf32, #tpu.memory_space<vmem>>, vector<8x8xf32>
    tpu.vector_store %arg12[%c0_31, %c0_32], %47 {strides = array<i32>} : memref<8x8xf32, #tpu.memory_space<vmem>>, vector<8x8xf32>,
    return
  }
  func.func @transform_0(%arg0: i32) -> (i32, i32) {
    %c0_i32 = arith.constant 0 : i32
    %c0_i32_0 = arith.constant 0 : i32
    return %arg0, %c0_i32 : i32, i32
  }
  func.func @transform_1(%arg0: i32) -> (i32, i32) {
    %c0_i32 = arith.constant 0 : i32
    %c0_i32_0 = arith.constant 0 : i32
    %c0_i32_1 = arith.constant 0 : i32
    return %c0_i32, %c0_i32_0 : i32, i32
  }
  func.func @transform_2(%arg0: i32) -> (i32, i32) {
    %c0_i32 = arith.constant 0 : i32
    %c0_i32_0 = arith.constant 0 : i32
    %c0_i32_1 = arith.constant 0 : i32
    return %c0_i32, %c0_i32_0 : i32, i32
  }
  func.func @transform_3(%arg0: i32) -> (i32, i32) {
    %c0_i32 = arith.constant 0 : i32
    %c0_i32_0 = arith.constant 0 : i32
    %c0_i32_1 = arith.constant 0 : i32
    return %c0_i32, %c0_i32_0 : i32, i32
  }
  func.func @transform_4(%arg0: i32) -> (i32, i32) {
    %c0_i32 = arith.constant 0 : i32
    %c0_i32_0 = arith.constant 0 : i32
    %c0_i32_1 = arith.constant 0 : i32
    return %c0_i32, %c0_i32_0 : i32, i32
  }
  func.func @transform_5(%arg0: i32) -> (i32, i32) {
    %c0_i32 = arith.constant 0 : i32
    %c0_i32_0 = arith.constant 0 : i32
    %c0_i32_1 = arith.constant 0 : i32
    return %c0_i32, %c0_i32_0 : i32, i32
  }
  func.func @transform_6(%arg0: i32) -> (i32, i32) {
    %c0_i32 = arith.constant 0 : i32
    %c0_i32_0 = arith.constant 0 : i32
    %c0_i32_1 = arith.constant 0 : i32
    return %c0_i32, %c0_i32_0 : i32, i32
  }
  func.func @transform_7(%arg0: i32) -> (i32, i32) {
    %c0_i32 = arith.constant 0 : i32
    %c0_i32_0 = arith.constant 0 : i32
    %c0_i32_1 = arith.constant 0 : i32
    return %c0_i32, %c0_i32_0 : i32, i32
  }
  func.func @transform_8(%arg0: i32) -> (i32, i32) {
    %c0_i32 = arith.constant 0 : i32
    %c0_i32_0 = arith.constant 0 : i32
    %c0_i32_1 = arith.constant 0 : i32
    return %c0_i32, %c0_i32_0 : i32, i32
  }
  func.func @transform_9(%arg0: i32) -> (i32, i32) {
    %c0_i32 = arith.constant 0 : i32
    %c0_i32_0 = arith.constant 0 : i32
    %c0_i32_1 = arith.constant 0 : i32
    return %c0_i32, %c0_i32_0 : i32, i32
  }
  func.func @transform_10(%arg0: i32) -> (i32, i32) {
    %c0_i32 = arith.constant 0 : i32
    %c0_i32_0 = arith.constant 0 : i32
    %c0_i32_1 = arith.constant 0 : i32
    return %c0_i32, %c0_i32_0 : i32, i32
  }
  func.func @transform_11(%arg0: i32) -> (i32, i32) {
    %c0_i32 = arith.constant 0 : i32
    %c0_i32_0 = arith.constant 0 : i32
    return %arg0, %c0_i32 : i32, i32
  }
}

</mosaic_0001>

<llo_original>
// kernel: tpu_custom_call.1
$region0: #{tpu_custom_call.1}
  #allocation0 [shape = 'u32[]', space=smem, size = 0x4, offset = 0x4, fixed_abs, tag = 'smem constant byte address 0x4 - core index']
  #allocation1 [shape = 'u32[144,128]{1,0:T(1,128)}', space=vmem, size = 0x12000, scoped, tag = 'internal scratch']
  %s0 = inlined_call_operand.hbm [shape: bf16[8,32], index: 0, kind: input, shape index: {}]
  %s1 = inlined_call_operand.hbm [shape: bf16[32,256], index: 1, kind: input, shape index: {}]
  %s2 = inlined_call_operand.hbm [shape: f32[1,256], index: 2, kind: input, shape index: {}]
  %s3 = inlined_call_operand.vmem [shape: bf16[256,128], index: 3, kind: input, shape index: {}]
  %s4 = inlined_call_operand.hbm [shape: f32[1,128], index: 4, kind: input, shape index: {}]
  %s5 = inlined_call_operand.vmem [shape: bf16[128,64], index: 5, kind: input, shape index: {}]
  %s6 = inlined_call_operand.hbm [shape: f32[1,64], index: 6, kind: input, shape index: {}]
  %s7 = inlined_call_operand.vmem [shape: bf16[64,32], index: 7, kind: input, shape index: {}]
  %s8 = inlined_call_operand.hbm [shape: f32[1,32], index: 8, kind: input, shape index: {}]
  %s9 = inlined_call_operand.vmem [shape: bf16[32,8], index: 9, kind: input, shape index: {}]
  %s10 = inlined_call_operand.vmem [shape: f32[1,8], index: 10, kind: input, shape index: {}]
  %s11 = inlined_call_operand.hbm [shape: f32[8,8], index: 11, kind: output, shape index: {}]
  %s12 = sld [smem:[#allocation0]]
  $region78: #{tpu_custom_call.1} parent=0
    _
  %s14 = ssub.s32 1, %s12
  %s15 = scalar_select 0, %s14, %s12
  $region1: #{tpu_custom_call.1} parent=0
    #allocation2 [shape = 'u8[2048]{0}', space=vmem, size = 0x800, scoped, tag = 'input window, operand 0, single buffered']
    #allocation3 [shape = 's32[1]{0}', space=sflag, size = 0x4, scoped, tag = 'scoped memory for tpu_custom_call.1']
    #allocation4 [shape = 's32[1]{0}', space=sflag, size = 0x4, scoped, tag = 'scoped memory for tpu_custom_call.1']
    #allocation5 [shape = 'u8[16384]{0}', space=vmem, size = 0x4000, scoped, tag = 'input window, operand 1, single buffered']
    #allocation6 [shape = 's32[1]{0}', space=sflag, size = 0x4, scoped, tag = 'scoped memory for tpu_custom_call.1']
    #allocation7 [shape = 'u8[1024]{0}', space=vmem, size = 0x400, scoped, tag = 'input window, operand 2, single buffered']
    #allocation8 [shape = 'u8[512]{0}', space=vmem, size = 0x400, scoped, tag = 'input window, operand 4, single buffered']
    #allocation9 [shape = 's32[1]{0}', space=sflag, size = 0x4, scoped, tag = 'scoped memory for tpu_custom_call.1']
    #allocation10 [shape = 'u8[512]{0}', space=vmem, size = 0x400, scoped, tag = 'input window, operand 6, single buffered']
    #allocation11 [shape = 'u8[512]{0}', space=vmem, size = 0x400, scoped, tag = 'input window, operand 8, single buffered']
    #allocation12 [shape = 's32[1]{0}', space=sflag, size = 0x4, scoped, tag = 'scoped memory for tpu_custom_call.1']
    #allocation13 [shape = 'u8[4096]{0}', space=vmem, size = 0x1000, scoped, tag = 'output window, operand 0, single buffered']
    %16 = vsyncpa [#allocation3], 0
    %17 = vsyncpa [#allocation6], 0
    %18 = vsyncpa [#allocation9], 0
    %19 = vsyncpa [#allocation12], 0
    %20 = vsyncpa [#allocation4], 0
    // Predicated region
    $region2: #{tpu_custom_call.1} parent=1 // pred_check
      _
    $region3: #{tpu_custom_call.1} parent=1 // pred_check_branch
      %22 = sbr.rel (0) target = $region5
    $region4: #{tpu_custom_call.1} parent=1 // pred_region
      %s24 = ssub.s32 64, 64
      %25 = vsyncadd [#allocation3], %s24
      %s27 = sshll.u32 [#allocation2], 4
      %s28 = int_to_ptr.vmem [resolvable:$true] %s27
      %30 = dma.hbm_to_vmem [thread:$0]  %s0, 64, %s28, [#allocation3]
    $region5: #{tpu_custom_call.1} parent=1 // pred_fallthru
      _
    // Predicated region
    $region6: #{tpu_custom_call.1} parent=1 // pred_check
      _
    $region7: #{tpu_custom_call.1} parent=1 // pred_check_branch
      %32 = sbr.rel (0) target = $region9
    $region8: #{tpu_custom_call.1} parent=1 // pred_region
      %s34 = ssub.s32 512, 512
      %35 = vsyncadd [#allocation6], %s34
      %s36 = sshll.u32 [#allocation5], 4
      %s37 = int_to_ptr.vmem [resolvable:$true] %s36
      %42 = dma.hbm_to_vmem [thread:$0]  %s1, 512, %s37, [#allocation6], 128, 128, 8
    $region9: #{tpu_custom_call.1} parent=1 // pred_fallthru
      _
    // Predicated region
    $region10: #{tpu_custom_call.1} parent=1 // pred_check
      _
    $region11: #{tpu_custom_call.1} parent=1 // pred_check_branch
      %44 = sbr.rel (0) target = $region13
    $region12: #{tpu_custom_call.1} parent=1 // pred_region
      %s46 = ssub.s32 32, 32
      %47 = vsyncadd [#allocation6], %s46
      %s49 = sshll.u32 [#allocation7], 4
      %s50 = int_to_ptr.vmem [resolvable:$true] %s49
      %52 = dma.hbm_to_vmem [thread:$0]  %s2, 32, %s50, [#allocation6]
    $region13: #{tpu_custom_call.1} parent=1 // pred_fallthru
      _
    // Predicated region
    $region14: #{tpu_custom_call.1} parent=1 // pred_check
      _
    $region15: #{tpu_custom_call.1} parent=1 // pred_check_branch
      %54 = sbr.rel (0) target = $region17
    $region16: #{tpu_custom_call.1} parent=1 // pred_region
      _
    $region17: #{tpu_custom_call.1} parent=1 // pred_fallthru
      _
    // Predicated region
    $region18: #{tpu_custom_call.1} parent=1 // pred_check
      _
    $region19: #{tpu_custom_call.1} parent=1 // pred_check_branch
      %56 = sbr.rel (0) target = $region21
    $region20: #{tpu_custom_call.1} parent=1 // pred_region
      %s58 = ssub.s32 16, 16
      %59 = vsyncadd [#allocation9], %s58
      %s61 = sshll.u32 [#allocation8], 4
      %s62 = int_to_ptr.vmem [resolvable:$true] %s61
      %64 = dma.hbm_to_vmem [thread:$0]  %s4, 16, %s62, [#allocation9]
    $region21: #{tpu_custom_call.1} parent=1 // pred_fallthru
      _
    // Predicated region
    $region22: #{tpu_custom_call.1} parent=1 // pred_check
      _
    $region23: #{tpu_custom_call.1} parent=1 // pred_check_branch
      %66 = sbr.rel (0) target = $region25
    $region24: #{tpu_custom_call.1} parent=1 // pred_region
      _
    $region25: #{tpu_custom_call.1} parent=1 // pred_fallthru
      _
    // Predicated region
    $region26: #{tpu_custom_call.1} parent=1 // pred_check
      _
    $region27: #{tpu_custom_call.1} parent=1 // pred_check_branch
      %68 = sbr.rel (0) target = $region29
    $region28: #{tpu_custom_call.1} parent=1 // pred_region
      %s70 = ssub.s32 16, 16
      %71 = vsyncadd [#allocation9], %s70
      %s73 = sshll.u32 [#allocation10], 4
      %s74 = int_to_ptr.vmem [resolvable:$true] %s73
      %76 = dma.hbm_to_vmem [thread:$0]  %s6, 16, %s74, [#allocation9]
    $region29: #{tpu_custom_call.1} parent=1 // pred_fallthru
      _
    // Predicated region
    $region30: #{tpu_custom_call.1} parent=1 // pred_check
      _
    $region31: #{tpu_custom_call.1} parent=1 // pred_check_branch
      %78 = sbr.rel (0) target = $region33
    $region32: #{tpu_custom_call.1} parent=1 // pred_region
      _
    $region33: #{tpu_custom_call.1} parent=1 // pred_fallthru
      _
    // Predicated region
    $region34: #{tpu_custom_call.1} parent=1 // pred_check
      _
    $region35: #{tpu_custom_call.1} parent=1 // pred_check_branch
      %80 = sbr.rel (0) target = $region37
    $region36: #{tpu_custom_call.1} parent=1 // pred_region
      %s82 = ssub.s32 16, 16
      %83 = vsyncadd [#allocation12], %s82
      %s85 = sshll.u32 [#allocation11], 4
      %s86 = int_to_ptr.vmem [resolvable:$true] %s85
      %88 = dma.hbm_to_vmem [thread:$0]  %s8, 16, %s86, [#allocation12]
    $region37: #{tpu_custom_call.1} parent=1 // pred_fallthru
      _
    // Predicated region
    $region38: #{tpu_custom_call.1} parent=1 // pred_check
      _
    $region39: #{tpu_custom_call.1} parent=1 // pred_check_branch
      %90 = sbr.rel (0) target = $region41
    $region40: #{tpu_custom_call.1} parent=1 // pred_region
      _
    $region41: #{tpu_custom_call.1} parent=1 // pred_fallthru
      _
    // Predicated region
    $region42: #{tpu_custom_call.1} parent=1 // pred_check
      _
    $region43: #{tpu_custom_call.1} parent=1 // pred_check_branch
      %92 = sbr.rel (0) target = $region45
    $region44: #{tpu_custom_call.1} parent=1 // pred_region
      _
    $region45: #{tpu_custom_call.1} parent=1 // pred_fallthru
      _
    // Predicated region
    $region46: #{tpu_custom_call.1} parent=1 // pred_check
      _
    $region47: #{tpu_custom_call.1} parent=1 // pred_check_branch
      %94 = sbr.rel (0) target = $region49
    $region48: #{tpu_custom_call.1} parent=1 // pred_region
      %95 = dma.done [#allocation3], 64
    $region49: #{tpu_custom_call.1} parent=1 // pred_fallthru
      _
    // Predicated region
    $region50: #{tpu_custom_call.1} parent=1 // pred_check
      _
    $region51: #{tpu_custom_call.1} parent=1 // pred_check_branch
      %97 = sbr.rel (0) target = $region53
    $region52: #{tpu_custom_call.1} parent=1 // pred_region
      %98 = dma.done [#allocation6], 512
    $region53: #{tpu_custom_call.1} parent=1 // pred_fallthru
      _
    // Predicated region
    $region54: #{tpu_custom_call.1} parent=1 // pred_check
      _
    $region55: #{tpu_custom_call.1} parent=1 // pred_check_branch
      %100 = sbr.rel (0) target = $region57
    $region56: #{tpu_custom_call.1} parent=1 // pred_region
      %101 = dma.done [#allocation6], 32
    $region57: #{tpu_custom_call.1} parent=1 // pred_fallthru
      _
    // Predicated region
    $region58: #{tpu_custom_call.1} parent=1 // pred_check
      _
    $region59: #{tpu_custom_call.1} parent=1 // pred_check_branch
      %103 = sbr.rel (0) target = $region61
    $region60: #{tpu_custom_call.1} parent=1 // pred_region
      %104 = dma.done [#allocation9], 16
    $region61: #{tpu_custom_call.1} parent=1 // pred_fallthru
      _
    // Predicated region
    $region62: #{tpu_custom_call.1} parent=1 // pred_check
      _
    $region63: #{tpu_custom_call.1} parent=1 // pred_check_branch
      %106 = sbr.rel (0) target = $region65
    $region64: #{tpu_custom_call.1} parent=1 // pred_region
      %107 = dma.done [#allocation9], 16
    $region65: #{tpu_custom_call.1} parent=1 // pred_fallthru
      _
    // Predicated region
    $region66: #{tpu_custom_call.1} parent=1 // pred_check
      _
    $region67: #{tpu_custom_call.1} parent=1 // pred_check_branch
      %109 = sbr.rel (0) target = $region69
    $region68: #{tpu_custom_call.1} parent=1 // pred_region
      %110 = dma.done [#allocation12], 16
    $region69: #{tpu_custom_call.1} parent=1 // pred_fallthru
      _
    %v112 = vld [vmem:[#allocation2] sm:$0xf]
    %v113 = vld [vmem:[#allocation5] sm:$0xff]
    %v114 = vld [vmem:[#allocation5 + $0x8] sm:$0xff]
    %v115 = vld [vmem:[#allocation5 + $0x10] sm:$0xff]
    %v116 = vld [vmem:[#allocation5 + $0x18] sm:$0xff]
    %v117 = vld [vmem:[#allocation7] sm:$0x3]
    %v119 = vlaneseq
    %v120 = vshrl.u32 %v119, 7
    %v121 = vsub.s32 0, %v120
    %v122 = vrot.slane %v117, %v121
    %v123 = vlaneseq
    %v124 = vshrl.u32 %v123, 7
    %v125 = vsub.s32 1, %v124
    %v126 = vrot.slane %v117, %v125
    %v133 = vunpack.c.l.b16 %v113
    %v134 = vunpack.c.h.b16 %v113
    %v135 = vunpack.c.l.b16 %v114
    %v136 = vunpack.c.h.b16 %v114
    %v137 = vunpack.c.l.b16 %v115
    %v138 = vunpack.c.h.b16 %v115
    %v139 = vunpack.c.l.b16 %v116
    %v140 = vunpack.c.h.b16 %v116
    %v141 = vpack.c.b16 %v135, %v133
    %v142 = vpack.c.b16 %v136, %v134
    %v143 = vpack.c.b16 %v139, %v137
    %v144 = vpack.c.b16 %v140, %v138
    %vm149 = vcmask 261120
    %v151 = vsel %vm149, %v112, 0
    %153 = vmatprep.subr.bf16.mxu0 0
    %154 = vmatpush1.bf16.msra.mxu0 0
    %155 = vmatprep.subr.bf16.mxu0 0
    %156 = vmatpush1.bf16.msra.mxu0 0
    %157 = vmatprep.subr.bf16.mxu0 0
    %158 = vmatpush1.bf16.msra.mxu0 0
    %159 = vmatprep.subr.bf16.mxu0 0
    %160 = vmatpush1.bf16.msra.mxu0 0
    %161 = vmatprep.subr.bf16.mxu0 0
    %162 = vmatpush1.bf16.msra.mxu0 0
    %163 = vmatprep.subr.bf16.mxu0 0
    %164 = vmatpush1.bf16.msra.mxu0 0
    %165 = vmatprep.subr.bf16.mxu0 %v144
    %166 = vmatpush1.bf16.msra.mxu0 %v143
    %167 = vmatprep.subr.bf16.mxu0 %v142
    %168 = vmatpush1.bf16.msra.mxu0 %v141
    %169 = vmatprep.subr.bf16.mxu0 0
    %170 = vmatpush2.bf16.msra.mxu0 0
    %171 = vmatprep.subr.bf16.mxu0 0
    %172 = vmatpush2.bf16.msra.mxu0 0
    %173 = vmatprep.subr.bf16.mxu0 0
    %174 = vmatpush2.bf16.msra.mxu0 0
    %175 = vmatprep.subr.bf16.mxu0 0
    %176 = vmatpush2.bf16.msra.mxu0 0
    %177 = vmatprep.subr.bf16.mxu0 0
    %178 = vmatpush2.bf16.msra.mxu0 0
    %179 = vmatprep.subr.bf16.mxu0 0
    %180 = vmatpush2.bf16.msra.mxu0 0
    %181 = vmatprep.subr.bf16.mxu0 0
    %182 = vmatpush2.bf16.msra.mxu0 0
    %183 = vmatprep.subr.bf16.mxu0 0
    %184 = vmatpush2.bf16.msra.mxu0 0
    %185 = vmatprep.mubr.bf16.mxu0 0
    %186 = vmatmul.mubr.bf16.gmra.mxu0 %v151
    %v187 = vpop.f32.mrf.mxu0
    %v188 = vadd.f32 %v122, %v187
    %v189 = vpop.f32.mrf.mxu0
    %v190 = vadd.f32 %v126, %v189
    %v191 = vpop.f32.mrf.mxu0
    %v192 = vpop.f32.mrf.mxu0
    %193 = vdwg.mxu0
    %v194 = vmax.f32 %v188, 0.0
    %v195 = vmax.f32 %v190, 0.0
    %v196 = vpack.c.bf16 %v194, %v194
    %v197 = vpack.c.bf16 %v195, %v195
    %v198 = vld [vmem:[%s3] sm:$0xf]
    %v199 = vld [vmem:[%s3 + $0x4] sm:$0xf]
    %v200 = vld [vmem:[%s3 + $0x8] sm:$0xf]
    %v201 = vld [vmem:[%s3 + $0xc] sm:$0xf]
    %v202 = vld [vmem:[%s3 + $0x10] sm:$0xf]
    %v203 = vld [vmem:[%s3 + $0x14] sm:$0xf]
    %v204 = vld [vmem:[%s3 + $0x18] sm:$0xf]
    %v205 = vld [vmem:[%s3 + $0x1c] sm:$0xf]
    %v206 = vld [vmem:[%s3 + $0x20] sm:$0xf]
    %v207 = vld [vmem:[%s3 + $0x24] sm:$0xf]
    %v208 = vld [vmem:[%s3 + $0x28] sm:$0xf]
    %v209 = vld [vmem:[%s3 + $0x2c] sm:$0xf]
    %v210 = vld [vmem:[%s3 + $0x30] sm:$0xf]
    %v211 = vld [vmem:[%s3 + $0x34] sm:$0xf]
    %v212 = vld [vmem:[%s3 + $0x38] sm:$0xf]
    %v213 = vld [vmem:[%s3 + $0x3c] sm:$0xf]
    %v214 = vld [vmem:[%s3 + $0x40] sm:$0xf]
    %v215 = vld [vmem:[%s3 + $0x44] sm:$0xf]
    %v216 = vld [vmem:[%s3 + $0x48] sm:$0xf]
    %v217 = vld [vmem:[%s3 + $0x4c] sm:$0xf]
    %v218 = vld [vmem:[%s3 + $0x50] sm:$0xf]
    %v219 = vld [vmem:[%s3 + $0x54] sm:$0xf]
    %v220 = vld [vmem:[%s3 + $0x58] sm:$0xf]
    %v221 = vld [vmem:[%s3 + $0x5c] sm:$0xf]
    %v222 = vld [vmem:[%s3 + $0x60] sm:$0xf]
    %v223 = vld [vmem:[%s3 + $0x64] sm:$0xf]
    %v224 = vld [vmem:[%s3 + $0x68] sm:$0xf]
    %v225 = vld [vmem:[%s3 + $0x6c] sm:$0xf]
    %v226 = vld [vmem:[%s3 + $0x70] sm:$0xf]
    %v227 = vld [vmem:[%s3 + $0x74] sm:$0xf]
    %v228 = vld [vmem:[%s3 + $0x78] sm:$0xf]
    %v229 = vld [vmem:[%s3 + $0x7c] sm:$0xf]
    %v230 = vld [vmem:[#allocation8] sm:$0x1]
    %v232 = vlaneseq
    %v233 = vshrl.u32 %v232, 7
    %v234 = vsub.s32 0, %v233
    %v235 = vrot.slane %v230, %v234
    %v269 = vunpack.c.l.b16 %v198
    %v270 = vunpack.c.l.b16 %v199
    %v271 = vunpack.c.l.b16 %v200
    %v272 = vunpack.c.l.b16 %v201
    %v273 = vunpack.c.l.b16 %v202
    %v274 = vunpack.c.l.b16 %v203
    %v275 = vunpack.c.l.b16 %v204
    %v276 = vunpack.c.l.b16 %v205
    %v277 = vunpack.c.l.b16 %v206
    %v278 = vunpack.c.l.b16 %v207
    %v279 = vunpack.c.l.b16 %v208
    %v280 = vunpack.c.l.b16 %v209
    %v281 = vunpack.c.l.b16 %v210
    %v282 = vunpack.c.l.b16 %v211
    %v283 = vunpack.c.l.b16 %v212
    %v284 = vunpack.c.l.b16 %v213
    %v285 = vunpack.c.l.b16 %v214
    %v286 = vunpack.c.l.b16 %v215
    %v287 = vunpack.c.l.b16 %v216
    %v288 = vunpack.c.l.b16 %v217
    %v289 = vunpack.c.l.b16 %v218
    %v290 = vunpack.c.l.b16 %v219
    %v291 = vunpack.c.l.b16 %v220
    %v292 = vunpack.c.l.b16 %v221
    %v293 = vunpack.c.l.b16 %v222
    %v294 = vunpack.c.l.b16 %v223
    %v295 = vunpack.c.l.b16 %v224
    %v296 = vunpack.c.l.b16 %v225
    %v297 = vunpack.c.l.b16 %v226
    %v298 = vunpack.c.l.b16 %v227
    %v299 = vunpack.c.l.b16 %v228
    %v300 = vunpack.c.l.b16 %v229
    %v301 = vpack.c.b16 %v270, %v269
    %v302 = vpack.c.b16 %v272, %v271
    %v303 = vpack.c.b16 %v274, %v273
    %v304 = vpack.c.b16 %v276, %v275
    %v305 = vpack.c.b16 %v278, %v277
    %v306 = vpack.c.b16 %v280, %v279
    %v307 = vpack.c.b16 %v282, %v281
    %v308 = vpack.c.b16 %v284, %v283
    %v309 = vpack.c.b16 %v286, %v285
    %v310 = vpack.c.b16 %v288, %v287
    %v311 = vpack.c.b16 %v290, %v289
    %v312 = vpack.c.b16 %v292, %v291
    %v313 = vpack.c.b16 %v294, %v293
    %v314 = vpack.c.b16 %v296, %v295
    %v315 = vpack.c.b16 %v298, %v297
    %v316 = vpack.c.b16 %v300, %v299
    %333 = vmatprep.subr.bf16.mxu0 0
    %334 = vmatpush1.bf16.msra.mxu0 %v308
    %335 = vmatprep.subr.bf16.mxu0 0
    %336 = vmatpush1.bf16.msra.mxu0 %v307
    %337 = vmatprep.subr.bf16.mxu0 0
    %338 = vmatpush1.bf16.msra.mxu0 %v306
    %339 = vmatprep.subr.bf16.mxu0 0
    %340 = vmatpush1.bf16.msra.mxu0 %v305
    %341 = vmatprep.subr.bf16.mxu0 0
    %342 = vmatpush1.bf16.msra.mxu0 %v304
    %343 = vmatprep.subr.bf16.mxu0 0
    %344 = vmatpush1.bf16.msra.mxu0 %v303
    %345 = vmatprep.subr.bf16.mxu0 0
    %346 = vmatpush1.bf16.msra.mxu0 %v302
    %347 = vmatprep.subr.bf16.mxu0 0
    %348 = vmatpush1.bf16.msra.mxu0 %v301
    %349 = vmatprep.subr.bf16.mxu0 0
    %350 = vmatpush2.bf16.msra.mxu0 %v316
    %351 = vmatprep.subr.bf16.mxu0 0
    %352 = vmatpush2.bf16.msra.mxu0 %v315
    %353 = vmatprep.subr.bf16.mxu0 0
    %354 = vmatpush2.bf16.msra.mxu0 %v314
    %355 = vmatprep.subr.bf16.mxu0 0
    %356 = vmatpush2.bf16.msra.mxu0 %v313
    %357 = vmatprep.subr.bf16.mxu0 0
    %358 = vmatpush2.bf16.msra.mxu0 %v312
    %359 = vmatprep.subr.bf16.mxu0 0
    %360 = vmatpush2.bf16.msra.mxu0 %v311
    %361 = vmatprep.subr.bf16.mxu0 0
    %362 = vmatpush2.bf16.msra.mxu0 %v310
    %363 = vmatprep.subr.bf16.mxu0 0
    %364 = vmatpush2.bf16.msra.mxu0 %v309
    %365 = vmatprep.mubr.bf16.mxu0 %v197
    %366 = vmatmul.mubr.bf16.gmra.mxu0 %v196
    %v367 = vpop.f32.mrf.mxu0
    %v368 = vadd.f32 %v235, %v367
    %v369 = vpop.f32.mrf.mxu0
    %v370 = vpop.f32.mrf.mxu0
    %v371 = vpop.f32.mrf.mxu0
    %372 = vdwg.mxu0
    %v373 = vmax.f32 %v368, 0.0
    %v374 = vpack.c.bf16 %v373, %v373
    %v375 = vld [vmem:[%s5] sm:$0xf]
    %v376 = vld [vmem:[%s5 + $0x4] sm:$0xf]
    %v377 = vld [vmem:[%s5 + $0x8] sm:$0xf]
    %v378 = vld [vmem:[%s5 + $0xc] sm:$0xf]
    %v379 = vld [vmem:[%s5 + $0x10] sm:$0xf]
    %v380 = vld [vmem:[%s5 + $0x14] sm:$0xf]
    %v381 = vld [vmem:[%s5 + $0x18] sm:$0xf]
    %v382 = vld [vmem:[%s5 + $0x1c] sm:$0xf]
    %v383 = vld [vmem:[%s5 + $0x20] sm:$0xf]
    %v384 = vld [vmem:[%s5 + $0x24] sm:$0xf]
    %v385 = vld [vmem:[%s5 + $0x28] sm:$0xf]
    %v386 = vld [vmem:[%s5 + $0x2c] sm:$0xf]
    %v387 = vld [vmem:[%s5 + $0x30] sm:$0xf]
    %v388 = vld [vmem:[%s5 + $0x34] sm:$0xf]
    %v389 = vld [vmem:[%s5 + $0x38] sm:$0xf]
    %v390 = vld [vmem:[%s5 + $0x3c] sm:$0xf]
    %v391 = vld [vmem:[#allocation10] sm:$0x1]
    %v393 = vlaneseq
    %v394 = vshrl.u32 %v393, 7
    %v395 = vsub.s32 0, %v394
    %v396 = vrot.slane %v391, %v395
    %v414 = vunpack.c.l.b16 %v375
    %v415 = vunpack.c.l.b16 %v376
    %v416 = vunpack.c.l.b16 %v377
    %v417 = vunpack.c.l.b16 %v378
    %v418 = vunpack.c.l.b16 %v379
    %v419 = vunpack.c.l.b16 %v380
    %v420 = vunpack.c.l.b16 %v381
    %v421 = vunpack.c.l.b16 %v382
    %v422 = vunpack.c.l.b16 %v383
    %v423 = vunpack.c.l.b16 %v384
    %v424 = vunpack.c.l.b16 %v385
    %v425 = vunpack.c.l.b16 %v386
    %v426 = vunpack.c.l.b16 %v387
    %v427 = vunpack.c.l.b16 %v388
    %v428 = vunpack.c.l.b16 %v389
    %v429 = vunpack.c.l.b16 %v390
    %v430 = vpack.c.b16 %v415, %v414
    %v431 = vpack.c.b16 %v417, %v416
    %v432 = vpack.c.b16 %v419, %v418
    %v433 = vpack.c.b16 %v421, %v420
    %v434 = vpack.c.b16 %v423, %v422
    %v435 = vpack.c.b16 %v425, %v424
    %v436 = vpack.c.b16 %v427, %v426
    %v437 = vpack.c.b16 %v429, %v428
    %446 = vmatprep.subr.bf16.mxu0 0
    %447 = vmatpush1.bf16.msra.mxu0 %v437
    %448 = vmatprep.subr.bf16.mxu0 0
    %449 = vmatpush1.bf16.msra.mxu0 %v436
    %450 = vmatprep.subr.bf16.mxu0 0
    %451 = vmatpush1.bf16.msra.mxu0 %v435
    %452 = vmatprep.subr.bf16.mxu0 0
    %453 = vmatpush1.bf16.msra.mxu0 %v434
    %454 = vmatprep.subr.bf16.mxu0 0
    %455 = vmatpush1.bf16.msra.mxu0 %v433
    %456 = vmatprep.subr.bf16.mxu0 0
    %457 = vmatpush1.bf16.msra.mxu0 %v432
    %458 = vmatprep.subr.bf16.mxu0 0
    %459 = vmatpush1.bf16.msra.mxu0 %v431
    %460 = vmatprep.subr.bf16.mxu0 0
    %461 = vmatpush1.bf16.msra.mxu0 %v430
    %462 = vmatprep.subr.bf16.mxu0 0
    %463 = vmatpush2.bf16.msra.mxu0 0
    %464 = vmatprep.subr.bf16.mxu0 0
    %465 = vmatpush2.bf16.msra.mxu0 0
    %466 = vmatprep.subr.bf16.mxu0 0
    %467 = vmatpush2.bf16.msra.mxu0 0
    %468 = vmatprep.subr.bf16.mxu0 0
    %469 = vmatpush2.bf16.msra.mxu0 0
    %470 = vmatprep.subr.bf16.mxu0 0
    %471 = vmatpush2.bf16.msra.mxu0 0
    %472 = vmatprep.subr.bf16.mxu0 0
    %473 = vmatpush2.bf16.msra.mxu0 0
    %474 = vmatprep.subr.bf16.mxu0 0
    %475 = vmatpush2.bf16.msra.mxu0 0
    %476 = vmatprep.subr.bf16.mxu0 0
    %477 = vmatpush2.bf16.msra.mxu0 0
    %478 = vmatprep.mubr.bf16.mxu0 0
    %479 = vmatmul.mubr.bf16.gmra.mxu0 %v374
    %v480 = vpop.f32.mrf.mxu0
    %v481 = vadd.f32 %v396, %v480
    %v482 = vpop.f32.mrf.mxu0
    %v483 = vpop.f32.mrf.mxu0
    %v484 = vpop.f32.mrf.mxu0
    %485 = vdwg.mxu0
    %v486 = vmax.f32 %v481, 0.0
    %v487 = vpack.c.bf16 %v486, %v486
    %v488 = vld [vmem:[%s7] sm:$0xf]
    %v489 = vld [vmem:[%s7 + $0x4] sm:$0xf]
    %v490 = vld [vmem:[%s7 + $0x8] sm:$0xf]
    %v491 = vld [vmem:[%s7 + $0xc] sm:$0xf]
    %v492 = vld [vmem:[%s7 + $0x10] sm:$0xf]
    %v493 = vld [vmem:[%s7 + $0x14] sm:$0xf]
    %v494 = vld [vmem:[%s7 + $0x18] sm:$0xf]
    %v495 = vld [vmem:[%s7 + $0x1c] sm:$0xf]
    %v496 = vld [vmem:[#allocation11] sm:$0x1]
    %v498 = vlaneseq
    %v499 = vshrl.u32 %v498, 7
    %v500 = vsub.s32 0, %v499
    %v501 = vrot.slane %v496, %v500
    %v511 = vunpack.c.l.b16 %v488
    %v512 = vunpack.c.l.b16 %v489
    %v513 = vunpack.c.l.b16 %v490
    %v514 = vunpack.c.l.b16 %v491
    %v515 = vunpack.c.l.b16 %v492
    %v516 = vunpack.c.l.b16 %v493
    %v517 = vunpack.c.l.b16 %v494
    %v518 = vunpack.c.l.b16 %v495
    %v519 = vpack.c.b16 %v512, %v511
    %v520 = vpack.c.b16 %v514, %v513
    %v521 = vpack.c.b16 %v516, %v515
    %v522 = vpack.c.b16 %v518, %v517
    %vm527 = vcmask 523264
    %v529 = vsel %vm527, %v487, 0
    %531 = vmatprep.subr.bf16.mxu0 0
    %532 = vmatpush1.bf16.msra.mxu0 0
    %533 = vmatprep.subr.bf16.mxu0 0
    %534 = vmatpush1.bf16.msra.mxu0 0
    %535 = vmatprep.subr.bf16.mxu0 0
    %536 = vmatpush1.bf16.msra.mxu0 0
    %537 = vmatprep.subr.bf16.mxu0 0
    %538 = vmatpush1.bf16.msra.mxu0 0
    %539 = vmatprep.subr.bf16.mxu0 0
    %540 = vmatpush1.bf16.msra.mxu0 %v522
    %541 = vmatprep.subr.bf16.mxu0 0
    %542 = vmatpush1.bf16.msra.mxu0 %v521
    %543 = vmatprep.subr.bf16.mxu0 0
    %544 = vmatpush1.bf16.msra.mxu0 %v520
    %545 = vmatprep.subr.bf16.mxu0 0
    %546 = vmatpush1.bf16.msra.mxu0 %v519
    %547 = vmatprep.subr.bf16.mxu0 0
    %548 = vmatpush2.bf16.msra.mxu0 0
    %549 = vmatprep.subr.bf16.mxu0 0
    %550 = vmatpush2.bf16.msra.mxu0 0
    %551 = vmatprep.subr.bf16.mxu0 0
    %552 = vmatpush2.bf16.msra.mxu0 0
    %553 = vmatprep.subr.bf16.mxu0 0
    %554 = vmatpush2.bf16.msra.mxu0 0
    %555 = vmatprep.subr.bf16.mxu0 0
    %556 = vmatpush2.bf16.msra.mxu0 0
    %557 = vmatprep.subr.bf16.mxu0 0
    %558 = vmatpush2.bf16.msra.mxu0 0
    %559 = vmatprep.subr.bf16.mxu0 0
    %560 = vmatpush2.bf16.msra.mxu0 0
    %561 = vmatprep.subr.bf16.mxu0 0
    %562 = vmatpush2.bf16.msra.mxu0 0
    %563 = vmatprep.mubr.bf16.mxu0 0
    %564 = vmatmul.mubr.bf16.gmra.mxu0 %v529
    %v565 = vpop.f32.mrf.mxu0
    %v566 = vadd.f32 %v501, %v565
    %v567 = vpop.f32.mrf.mxu0
    %v568 = vpop.f32.mrf.mxu0
    %v569 = vpop.f32.mrf.mxu0
    %570 = vdwg.mxu0
    %v571 = vmax.f32 %v566, 0.0
    %v572 = vpack.c.bf16 %v571, %v571
    %v573 = vld [vmem:[%s9] sm:$0xf]
    %v574 = vld [vmem:[%s9 + $0x4] sm:$0xf]
    %v575 = vld [vmem:[%s9 + $0x8] sm:$0xf]
    %v576 = vld [vmem:[%s9 + $0xc] sm:$0xf]
    %v577 = vld [vmem:[%s10] sm:$0x1]
    %v579 = vlaneseq
    %v580 = vshrl.u32 %v579, 7
    %v581 = vsub.s32 0, %v580
    %v582 = vrot.slane %v577, %v581
    %v588 = vunpack.c.l.b16 %v573
    %v589 = vunpack.c.l.b16 %v574
    %v590 = vunpack.c.l.b16 %v575
    %v591 = vunpack.c.l.b16 %v576
    %v592 = vpack.c.b16 %v589, %v588
    %v593 = vpack.c.b16 %v591, %v590
    %v597 = vsel %vm149, %v572, 0
    %599 = vmatprep.subr.bf16.mxu0 0
    %600 = vmatpush1.bf16.msra.mxu0 0
    %601 = vmatprep.subr.bf16.mxu0 0
    %602 = vmatpush1.bf16.msra.mxu0 0
    %603 = vmatprep.subr.bf16.mxu0 0
    %604 = vmatpush1.bf16.msra.mxu0 0
    %605 = vmatprep.subr.bf16.mxu0 0
    %606 = vmatpush1.bf16.msra.mxu0 0
    %607 = vmatprep.subr.bf16.mxu0 0
    %608 = vmatpush1.bf16.msra.mxu0 0
    %609 = vmatprep.subr.bf16.mxu0 0
    %610 = vmatpush1.bf16.msra.mxu0 0
    %611 = vmatprep.subr.bf16.mxu0 0
    %612 = vmatpush1.bf16.msra.mxu0 %v593
    %613 = vmatprep.subr.bf16.mxu0 0
    %614 = vmatpush1.bf16.msra.mxu0 %v592
    %615 = vmatprep.subr.bf16.mxu0 0
    %616 = vmatpush2.bf16.msra.mxu0 0
    %617 = vmatprep.subr.bf16.mxu0 0
    %618 = vmatpush2.bf16.msra.mxu0 0
    %619 = vmatprep.subr.bf16.mxu0 0
    %620 = vmatpush2.bf16.msra.mxu0 0
    %621 = vmatprep.subr.bf16.mxu0 0
    %622 = vmatpush2.bf16.msra.mxu0 0
    %623 = vmatprep.subr.bf16.mxu0 0
    %624 = vmatpush2.bf16.msra.mxu0 0
    %625 = vmatprep.subr.bf16.mxu0 0
    %626 = vmatpush2.bf16.msra.mxu0 0
    %627 = vmatprep.subr.bf16.mxu0 0
    %628 = vmatpush2.bf16.msra.mxu0 0
    %629 = vmatprep.subr.bf16.mxu0 0
    %630 = vmatpush2.bf16.msra.mxu0 0
    %631 = vmatprep.mubr.bf16.mxu0 0
    %632 = vmatmul.mubr.bf16.gmra.mxu0 %v597
    %v633 = vpop.f32.mrf.mxu0
    %v634 = vadd.f32 %v582, %v633
    %v635 = vpop.f32.mrf.mxu0
    %v636 = vpop.f32.mrf.mxu0
    %v637 = vpop.f32.mrf.mxu0
    %638 = vdwg.mxu0
    %vm639 = vcmask 64512
    %v640 = vsel %vm639, %v634, -inf
    %641 = vmax.xlane.f32.xlu0 %v640
    %v642 = vpop.xlane.xlu0 %641
    %v643 = vsub.f32 %v634, %v642
    %v644 = vmul.f32 %v643, 1.442695
    %v645 = vpow.pop %v644
    %v646 = vsel %vm639, %v645, 0.0
    %647 = vadd.xlane.f32.xlu0 %v646
    %v648 = vpop.xlane.xlu0 %647
    %v649 = vrcp.pop %v648
    %v650 = vmul.f32 %v645, %v649
    %651 = vst.msk [vmem:[#allocation13] sm:$0xff] %vm639, %v650
    // Predicated region
    $region70: #{tpu_custom_call.1} parent=1 // pred_check
      _
    $region71: #{tpu_custom_call.1} parent=1 // pred_check_branch
      %653 = sbr.rel (0) target = $region73
    $region72: #{tpu_custom_call.1} parent=1 // pred_region
      %s655 = ssub.s32 128, 128
      %656 = vsyncadd [#allocation4], %s655
      %s658 = sshll.u32 [#allocation13], 4
      %s659 = int_to_ptr.vmem [resolvable:$true] %s658
      %661 = dma.vmem_to_hbm [thread:$0]  %s659, 128, %s11, [#allocation4]
    $region73: #{tpu_custom_call.1} parent=1 // pred_fallthru
      _
    // Predicated region
    $region74: #{tpu_custom_call.1} parent=1 // pred_check
      _
    $region75: #{tpu_custom_call.1} parent=1 // pred_check_branch
      %663 = sbr.rel (0) target = $region77
    $region76: #{tpu_custom_call.1} parent=1 // pred_region
      %664 = dma.done [#allocation4], 128
    $region77: #{tpu_custom_call.1} parent=1 // pred_fallthru
      _
    %665 = vsyncpa [#allocation3], 1
    %666 = vsyncpa [#allocation6], 1
    %667 = vsyncpa [#allocation9], 1
    %668 = vsyncpa [#allocation12], 1
    %669 = vsyncpa [#allocation4], 1

</llo_original>
